<compile_context>
chip_gen: v5e
topology: v5e:2x2
jax: 0.10.0
libtpu: 0.0.40
codegen_flags: <defaults>
</compile_context>

<pallas_src>
import functools

import jax
import jax.numpy as jnp
from jax.experimental import pallas as pl
from jax.experimental.pallas import tpu as pltpu

LANE = 128
MAX_TILE = 8192  # rows per grid step; typical REINFORCE batches fit in one tile


def _round_up(x, m):
    return ((x + m - 1) // m) * m


def policy_kernel(x_ref, w1_ref, b1_ref, w2_ref, b2_ref, out_ref):
    x = x_ref[...]                                                   # (tB, S)
    # --- layer 1: Linear + ReLU (MXU matmul, VPU max), lane-dense hidden ---
    h = jnp.dot(x, w1_ref[...], preferred_element_type=jnp.float32) + b1_ref[...]
    h = jnp.maximum(h, 0.0)                                          # (tB, Hp)
    # --- layer 2: Linear; pad action lanes carry bias -1e30 -> exp == 0 ---
    logits = jnp.dot(h, w2_ref[...], preferred_element_type=jnp.float32) + b2_ref[...]
    # --- numerically stable softmax over the (padded) action axis ---
    m = jnp.max(logits, axis=-1, keepdims=True)
    e = jnp.exp(logits - m)
    denom = jnp.sum(e, axis=-1, keepdims=True)                       # pad lanes add 0
    probs = e / denom                                                # exact divide
    # Store only the real action lanes (out_ref last dim == true action_dim).
    a = out_ref.shape[-1]
    out_ref[...] = probs[:, :a].astype(out_ref.dtype)


def init_policy_params(key, state_dim, action_dim, hidden_width):
    """Deterministic init mimicking nn.Linear default (uniform +/- 1/sqrt(fan_in)).
    Weights are stored as (in, out) == PyTorch weight.T."""
    k1, k2, k3, k4 = jax.random.split(key, 4)
    bound1 = 1.0 / jnp.sqrt(state_dim)
    bound2 = 1.0 / jnp.sqrt(hidden_width)
    w1 = jax.random.uniform(k1, (state_dim, hidden_width), jnp.float32, -bound1, bound1)
    b1 = jax.random.uniform(k2, (1, hidden_width), jnp.float32, -bound1, bound1)
    w2 = jax.random.uniform(k3, (hidden_width, action_dim), jnp.float32, -bound2, bound2)
    b2 = jax.random.uniform(k4, (1, action_dim), jnp.float32, -bound2, bound2)
    return w1, b1, w2, b2


def prepare_policy_params(w1, b1, w2, b2):
    """One-time lane-padding of the parameters (hoisted out of the hot path).

    Returns (w1p, b1p, w2p, b2p, action_dim): padded params stay VMEM-resident
    across all grid steps via constant index_maps in the pallas_call.
    """
    state_dim, hidden = w1.shape
    action_dim = w2.shape[1]
    h_pad = _round_up(hidden, LANE)
    a_pad = _round_up(action_dim, LANE)

    w1p = jnp.zeros((state_dim, h_pad), jnp.float32).at[:, :hidden].set(w1)
    b1p = jnp.zeros((1, h_pad), jnp.float32).at[:, :hidden].set(jnp.reshape(b1, (1, -1)))
    w2p = jnp.zeros((h_pad, a_pad), jnp.float32).at[:hidden, :action_dim].set(w2)
    # -1e30 on pad action lanes -> exp(pad - max) == 0; softmax unaffected
    # (safe in f32 as long as real logits stay far above -1e30).
    b2p = jnp.full((1, a_pad), -1e30, jnp.float32).at[:, :action_dim].set(
        jnp.reshape(b2, (1, -1)))
    return w1p, b1p, w2p, b2p, action_dim


@functools.partial(jax.jit, static_argnames=("action_dim",))
def policy_forward(s, w1p, b1p, w2p, b2p, *, action_dim):
    """s: (B, state_dim) f32; returns (B, action_dim) f32 action probabilities."""
    batch, state_dim = s.shape
    h_pad = w1p.shape[1]
    a_pad = w2p.shape[1]

    # --- batch tiling: one tile for typical batches; even tile count otherwise ---
    b_min = _round_up(batch, 8)
    if b_min <= MAX_TILE:
        n_tiles = 1
        tile = b_min
    else:
        n_tiles = pl.cdiv(b_min, MAX_TILE)
        n_tiles = _round_up(n_tiles, 2)                 # equal work on v7x's 2 TCs
        tile = _round_up(pl.cdiv(batch, n_tiles), 8)
    b_padded = tile * n_tiles
    s_p = s if b_padded == batch else jnp.pad(s, ((0, b_padded - batch), (0, 0)))

    cost = pl.CostEstimate(
        flops=2 * b_padded * state_dim * h_pad
              + 2 * b_padded * h_pad * a_pad
              + 6 * b_padded * a_pad,
        transcendentals=b_padded * a_pad,
        bytes_accessed=(s_p.size + b_padded * action_dim
                        + w1p.size + b1p.size + w2p.size + b2p.size) * 4,
    )

    out = pl.pallas_call(
        policy_kernel,
        out_shape=jax.ShapeDtypeStruct((b_padded, action_dim), jnp.float32),
        grid=(n_tiles,),
        in_specs=[
            pl.BlockSpec((tile, state_dim), lambda i: (i, 0)),   # activation stream
            pl.BlockSpec((state_dim, h_pad), lambda i: (0, 0)),  # weights: constant block,
            pl.BlockSpec((1, h_pad), lambda i: (0, 0)),          #   never re-DMA'd
            pl.BlockSpec((h_pad, a_pad), lambda i: (0, 0)),
            pl.BlockSpec((1, a_pad), lambda i: (0, 0)),
        ],
        # Last block dim == full array dim (action_dim), so the (8,128) rule holds;
        # stores only the real action lanes -> no 32x padded writeback.
        out_specs=pl.BlockSpec((tile, action_dim), lambda i: (i, 0)),
        compiler_params=pltpu.CompilerParams(
            dimension_semantics=("parallel",)),
        cost_estimate=cost,
    )(s_p, w1p, b1p, w2p, b2p)

    return out[:batch] if b_padded != batch else out


def policy_forward_ref(s, w1, b1, w2, b2):
    h = jnp.maximum(s @ w1 + b1, 0.0)
    return jax.nn.softmax(h @ w2 + b2, axis=1)


if __name__ == "__main__":
    state_dim, action_dim, hidden_width = 4, 4, 32

    key = jax.random.PRNGKey(0)
    k_x, k_p, k_mid, k_big = jax.random.split(key, 4)
    w1, b1, w2, b2 = init_policy_params(k_p, state_dim, action_dim, hidden_width)
    w1p, b1p, w2p, b2p, adim = prepare_policy_params(w1, b1, w2, b2)

    # Small, module-default-sized check (batch=2 -> single 8-row tile).
    s_small = jax.random.normal(k_x, (2, state_dim), dtype=jnp.float32)
    p_small = jax.block_until_ready(
        policy_forward(s_small, w1p, b1p, w2p, b2p, action_dim=adim))
    ref_small = policy_forward_ref(s_small, w1, b1, w2, b2)
    assert p_small.shape == (2, action_dim)
    assert jnp.allclose(p_small, ref_small, atol=1e-5, rtol=1e-5), (p_small, ref_small)
    assert jnp.allclose(jnp.sum(p_small, axis=1), 1.0, atol=1e-5)

    # Odd, non-multiple-of-8 batch exercising the batch-pad path.
    s_mid = jax.random.normal(k_mid, (13, state_dim), dtype=jnp.float32)
    p_mid = jax.block_until_ready(
        policy_forward(s_mid, w1p, b1p, w2p, b2p, action_dim=adim))
    ref_mid = policy_forward_ref(s_mid, w1, b1, w2, b2)
    assert p_mid.shape == (13, action_dim)
    assert jnp.allclose(p_mid, ref_mid, atol=1e-5, rtol=1e-5)

    # Rollout-style batch: still a single grid step (1024 <= MAX_TILE).
    s_big = jax.random.normal(k_big, (1024, state_dim), dtype=jnp.float32)
    p_big = jax.block_until_ready(
        policy_forward(s_big, w1p, b1p, w2p, b2p, action_dim=adim))
    ref_big = policy_forward_ref(s_big, w1, b1, w2, b2)
    assert p_big.shape == (1024, action_dim)
    assert jnp.allclose(p_big, ref_big, atol=1e-5, rtol=1e-5)
    assert jnp.allclose(jnp.sum(p_big, axis=1), 1.0, atol=1e-5)

    print("KERNEL_OK")
</pallas_src>

<mosaic_0001>
module attributes {stable_mosaic.version = 11 : i64} {
  func.func @policy_kernel(%arg0: i32, %arg1: memref<8x4xf32, #tpu.memory_space<vmem>>, %arg2: memref<4x128xf32, #tpu.memory_space<vmem>>, %arg3: memref<1x128xf32, #tpu.memory_space<vmem>>, %arg4: memref<128x128xf32, #tpu.memory_space<vmem>>, %arg5: memref<1x128xf32, #tpu.memory_space<vmem>>, %arg6: memref<8x4xf32, #tpu.memory_space<vmem>>) attributes {dimension_semantics = [#tpu.dimension_semantics<parallel>], iteration_bounds = array<i64: 1>, scalar_prefetch = 0 : i64, scratch_operands = 0 : i64, tpu.core_type = #tpu.core_type<tc>, window_params = [{transform_indices = @transform_0, window_bounds = array<i64: 8, 4>}, {pipeline_mode = #tpu.pipeline_mode<synchronous>, transform_indices = @transform_1, window_bounds = array<i64: 4, 128>}, {pipeline_mode = #tpu.pipeline_mode<synchronous>, transform_indices = @transform_2, window_bounds = array<i64: 1, 128>}, {pipeline_mode = #tpu.pipeline_mode<synchronous>, transform_indices = @transform_3, window_bounds = array<i64: 128, 128>}, {pipeline_mode = #tpu.pipeline_mode<synchronous>, transform_indices = @transform_4, window_bounds = array<i64: 1, 128>}, {transform_indices = @transform_5, window_bounds = array<i64: 8, 4>}]} {
    %c0 = arith.constant 0 : index
    %c0_0 = arith.constant 0 : index
    %0 = vector.load %arg1[%c0, %c0_0] : memref<8x4xf32, #tpu.memory_space<vmem>>, vector<8x4xf32>
    %c0_1 = arith.constant 0 : index
    %c0_2 = arith.constant 0 : index
    %1 = vector.load %arg2[%c0_1, %c0_2] : memref<4x128xf32, #tpu.memory_space<vmem>>, vector<4x128xf32>
    %cst = arith.constant dense<0.000000e+00> : vector<8x128xf32>
    %2 = tpu.matmul %0, %1, %cst {dimension_numbers = #tpu.dot_dimension_numbers<[1], [0], [0], [1], [0, 0, 1, 1], [], []>} : vector<8x4xf32>, vector<4x128xf32>, vector<8x128xf32> -> vector<8x128xf32>
    %c0_3 = arith.constant 0 : index
    %c0_4 = arith.constant 0 : index
    %3 = vector.load %arg3[%c0_3, %c0_4] : memref<1x128xf32, #tpu.memory_space<vmem>>, vector<1x128xf32>
    %4 = vector.broadcast %3 : vector<1x128xf32> to vector<8x128xf32>
    %5 = arith.addf %2, %4 : vector<8x128xf32>
    %cst_5 = arith.constant 0.000000e+00 : f32
    %6 = vector.broadcast %cst_5 : f32 to vector<8x128xf32>
    %7 = arith.maximumf %5, %6 : vector<8x128xf32>
    %c0_6 = arith.constant 0 : index
    %c0_7 = arith.constant 0 : index
    %8 = vector.load %arg4[%c0_6, %c0_7] : memref<128x128xf32, #tpu.memory_space<vmem>>, vector<128x128xf32>
    %cst_8 = arith.constant dense<0.000000e+00> : vector<8x128xf32>
    %9 = tpu.matmul %7, %8, %cst_8 {dimension_numbers = #tpu.dot_dimension_numbers<[1], [0], [0], [1], [0, 0, 1, 1], [], []>} : vector<8x128xf32>, vector<128x128xf32>, vector<8x128xf32> -> vector<8x128xf32>
    %c0_9 = arith.constant 0 : index
    %c0_10 = arith.constant 0 : index
    %10 = vector.load %arg5[%c0_9, %c0_10] : memref<1x128xf32, #tpu.memory_space<vmem>>, vector<1x128xf32>
    %11 = vector.broadcast %10 : vector<1x128xf32> to vector<8x128xf32>
    %12 = arith.addf %9, %11 : vector<8x128xf32>
    %cst_11 = arith.constant dense<0xFF800000> : vector<8xf32>
    %13 = vector.multi_reduction <maximumf>, %12, %cst_11 [1] : vector<8x128xf32> to vector<8xf32>
    %14 = vector.shape_cast %13 : vector<8xf32> to vector<8x1xf32>
    %15 = vector.broadcast %14 : vector<8x1xf32> to vector<8x128xf32>
    %16 = arith.subf %12, %15 : vector<8x128xf32>
    %17 = math.exp %16 : vector<8x128xf32>
    %cst_12 = arith.constant dense<0.000000e+00> : vector<8xf32>
    %18 = vector.multi_reduction <add>, %17, %cst_12 [1] : vector<8x128xf32> to vector<8xf32>
    %19 = vector.shape_cast %18 : vector<8xf32> to vector<8x1xf32>
    %20 = vector.broadcast %19 : vector<8x1xf32> to vector<8x128xf32>
    %21 = arith.divf %17, %20 : vector<8x128xf32>
    %22 = vector.extract_strided_slice %21 {offsets = [0, 0], sizes = [8, 4], strides = [1, 1]} : vector<8x128xf32> to vector<8x4xf32>
    %c0_13 = arith.constant 0 : index
    %c0_14 = arith.constant 0 : index
    %23 = vector.load %arg6[%c0_13, %c0_14] : memref<8x4xf32, #tpu.memory_space<vmem>>, vector<8x4xf32>
    tpu.vector_store %arg6[%c0_13, %c0_14], %22 {strides = array<i32>} : memref<8x4xf32, #tpu.memory_space<vmem>>, vector<8x4xf32>,
    return
  }
  func.func @transform_0(%arg0: i32) -> (i32, i32) {
    %c0_i32 = arith.constant 0 : i32
    %c0_i32_0 = arith.constant 0 : i32
    return %arg0, %c0_i32 : i32, i32
  }
  func.func @transform_1(%arg0: i32) -> (i32, i32) {
    %c0_i32 = arith.constant 0 : i32
    %c0_i32_0 = arith.constant 0 : i32
    %c0_i32_1 = arith.constant 0 : i32
    return %c0_i32, %c0_i32_0 : i32, i32
  }
  func.func @transform_2(%arg0: i32) -> (i32, i32) {
    %c0_i32 = arith.constant 0 : i32
    %c0_i32_0 = arith.constant 0 : i32
    %c0_i32_1 = arith.constant 0 : i32
    return %c0_i32, %c0_i32_0 : i32, i32
  }
  func.func @transform_3(%arg0: i32) -> (i32, i32) {
    %c0_i32 = arith.constant 0 : i32
    %c0_i32_0 = arith.constant 0 : i32
    %c0_i32_1 = arith.constant 0 : i32
    return %c0_i32, %c0_i32_0 : i32, i32
  }
  func.func @transform_4(%arg0: i32) -> (i32, i32) {
    %c0_i32 = arith.constant 0 : i32
    %c0_i32_0 = arith.constant 0 : i32
    %c0_i32_1 = arith.constant 0 : i32
    return %c0_i32, %c0_i32_0 : i32, i32
  }
  func.func @transform_5(%arg0: i32) -> (i32, i32) {
    %c0_i32 = arith.constant 0 : i32
    %c0_i32_0 = arith.constant 0 : i32
    return %arg0, %c0_i32 : i32, i32
  }
}

</mosaic_0001>

<llo_original>
// kernel: policy_forward.1
$region0: #{policy_forward.1}
  #allocation0 [shape = 'u32[]', space=smem, size = 0x4, offset = 0x4, fixed_abs, tag = 'smem constant byte address 0x4 - core index']
  #allocation1 [shape = 'u32[72,128]{1,0:T(1,128)}', space=vmem, size = 0x9000, scoped, tag = 'internal scratch']
  %s0 = inlined_call_operand.vmem [shape: f32[8,4], index: 0, kind: input, shape index: {}]
  %s1 = inlined_call_operand.vmem [shape: f32[4,128], index: 1, kind: input, shape index: {}]
  %s2 = inlined_call_operand.vmem [shape: f32[1,128], index: 2, kind: input, shape index: {}]
  %s3 = inlined_call_operand.hbm [shape: f32[128,128], index: 3, kind: input, shape index: {}]
  %s4 = inlined_call_operand.vmem [shape: f32[1,128], index: 4, kind: input, shape index: {}]
  %s5 = inlined_call_operand.vmem [shape: f32[8,4], index: 5, kind: output, shape index: {}]
  %s6 = sld [smem:[#allocation0]]
  $region34: #{policy_forward.1} parent=0
    _
  %s8 = ssub.s32 1, %s6
  %s9 = scalar_select 0, %s8, %s6
  $region1: #{policy_forward.1} parent=0
    #allocation2 [shape = 'u8[65536]{0}', space=vmem, size = 0x10000, scoped, tag = 'input window, operand 3, single buffered']
    #allocation3 [shape = 's32[1]{0}', space=sflag, size = 0x4, scoped, tag = 'scoped memory for policy_forward.1']
    %10 = vsyncpa [#allocation3], 0
    // Predicated region
    $region2: #{policy_forward.1} parent=1 // pred_check
      _
    $region3: #{policy_forward.1} parent=1 // pred_check_branch
      %12 = sbr.rel (0) target = $region5
    $region4: #{policy_forward.1} parent=1 // pred_region
      _
    $region5: #{policy_forward.1} parent=1 // pred_fallthru
      _
    // Predicated region
    $region6: #{policy_forward.1} parent=1 // pred_check
      _
    $region7: #{policy_forward.1} parent=1 // pred_check_branch
      %14 = sbr.rel (0) target = $region9
    $region8: #{policy_forward.1} parent=1 // pred_region
      _
    $region9: #{policy_forward.1} parent=1 // pred_fallthru
      _
    // Predicated region
    $region10: #{policy_forward.1} parent=1 // pred_check
      _
    $region11: #{policy_forward.1} parent=1 // pred_check_branch
      %16 = sbr.rel (0) target = $region13
    $region12: #{policy_forward.1} parent=1 // pred_region
      _
    $region13: #{policy_forward.1} parent=1 // pred_fallthru
      _
    // Predicated region
    $region14: #{policy_forward.1} parent=1 // pred_check
      _
    $region15: #{policy_forward.1} parent=1 // pred_check_branch
      %18 = sbr.rel (0) target = $region17
    $region16: #{policy_forward.1} parent=1 // pred_region
      %20 = vsyncadd [#allocation3], 0
      %s21 = sshll.u32 %s3, 4
      %s22 = int_to_ptr.hbm [resolvable:$true] %s21
      %s23 = sshll.u32 [#allocation2], 4
      %s24 = int_to_ptr.vmem [resolvable:$true] %s23
      %29 = dma.hbm_to_vmem [thread:$0]  %s22, 2048, %s24, [#allocation3], 128, 128, 8
    $region17: #{policy_forward.1} parent=1 // pred_fallthru
      _
    // Predicated region
    $region18: #{policy_forward.1} parent=1 // pred_check
      _
    $region19: #{policy_forward.1} parent=1 // pred_check_branch
      %31 = sbr.rel (0) target = $region21
    $region20: #{policy_forward.1} parent=1 // pred_region
      _
    $region21: #{policy_forward.1} parent=1 // pred_fallthru
      _
    // Predicated region
    $region22: #{policy_forward.1} parent=1 // pred_check
      _
    $region23: #{policy_forward.1} parent=1 // pred_check_branch
      %33 = sbr.rel (0) target = $region25
    $region24: #{policy_forward.1} parent=1 // pred_region
      %35 = dma.done [#allocation3], 2048
    $region25: #{policy_forward.1} parent=1 // pred_fallthru
      _
    %v36 = vld [vmem:[%s0] sm:$0xff]
    %v37 = vld [vmem:[%s1] sm:$0xf]
    %v38 = vld [vmem:[%s2] sm:$0x1]
    %v40 = vperm.slane %v38, 0
    %vm42 = vcmask 31744
    %v44 = vsel %vm42, %v36, 0
    %vm46 = vcmask 1043456
    %v48 = vsel %vm46, %v37, 0
    %50 = vmatpush.msra.mxu0 0.0
    %51 = vmatpush.msra.mxu0 0.0
    %52 = vmatpush.msra.mxu0 0.0
    %53 = vmatpush.msra.mxu0 0.0
    %54 = vmatpush.msra.mxu0 0.0
    %55 = vmatpush.msra.mxu0 0.0
    %56 = vmatpush.msra.mxu0 0.0
    %57 = vmatpush.msra.mxu0 0.0
    %58 = vmatpush.msra.mxu0 0.0
    %59 = vmatpush.msra.mxu0 0.0
    %60 = vmatpush.msra.mxu0 0.0
    %61 = vmatpush.msra.mxu0 0.0
    %62 = vmatpush.msra.mxu0 0.0
    %63 = vmatpush.msra.mxu0 0.0
    %64 = vmatpush.msra.mxu0 0.0
    %65 = vmatpush.msra.mxu0 %v48
    %66 = vmatmul.f32.gmra.mxu0 %v44
    %v67 = vpop.f32.mrf.mxu0
    %v68 = vadd.f32 %v40, %v67
    %69 = vdwg.mxu0
    %v70 = vmax.f32 %v68, 0.0
    %v71 = vld [vmem:[#allocation2] sm:$0xff]
    %v72 = vld [vmem:[#allocation2 + $0x8] sm:$0xff]
    %v73 = vld [vmem:[#allocation2 + $0x10] sm:$0xff]
    %v74 = vld [vmem:[#allocation2 + $0x18] sm:$0xff]
    %v75 = vld [vmem:[#allocation2 + $0x20] sm:$0xff]
    %v76 = vld [vmem:[#allocation2 + $0x28] sm:$0xff]
    %v77 = vld [vmem:[#allocation2 + $0x30] sm:$0xff]
    %v78 = vld [vmem:[#allocation2 + $0x38] sm:$0xff]
    %v79 = vld [vmem:[#allocation2 + $0x40] sm:$0xff]
    %v80 = vld [vmem:[#allocation2 + $0x48] sm:$0xff]
    %v81 = vld [vmem:[#allocation2 + $0x50] sm:$0xff]
    %v82 = vld [vmem:[#allocation2 + $0x58] sm:$0xff]
    %v83 = vld [vmem:[#allocation2 + $0x60] sm:$0xff]
    %v84 = vld [vmem:[#allocation2 + $0x68] sm:$0xff]
    %v85 = vld [vmem:[#allocation2 + $0x70] sm:$0xff]
    %v86 = vld [vmem:[#allocation2 + $0x78] sm:$0xff]
    %v87 = vld [vmem:[%s4] sm:$0x1]
    %v89 = vperm.slane %v87, 0
    %91 = vmatpush.msra.mxu0 %v86
    %92 = vmatpush.msra.mxu0 %v85
    %93 = vmatpush.msra.mxu0 %v84
    %94 = vmatpush.msra.mxu0 %v83
    %95 = vmatpush.msra.mxu0 %v82
    %96 = vmatpush.msra.mxu0 %v81
    %97 = vmatpush.msra.mxu0 %v80
    %98 = vmatpush.msra.mxu0 %v79
    %99 = vmatpush.msra.mxu0 %v78
    %100 = vmatpush.msra.mxu0 %v77
    %101 = vmatpush.msra.mxu0 %v76
    %102 = vmatpush.msra.mxu0 %v75
    %103 = vmatpush.msra.mxu0 %v74
    %104 = vmatpush.msra.mxu0 %v73
    %105 = vmatpush.msra.mxu0 %v72
    %106 = vmatpush.msra.mxu0 %v71
    %107 = vmatmul.f32.gmra.mxu0 %v70
    %v108 = vpop.f32.mrf.mxu0
    %v109 = vadd.f32 %v89, %v108
    %110 = vdwg.mxu0
    %111 = vmax.xlane.f32.xlu0 %v109
    %v112 = vpop.xlane.xlu0 %111
    %v113 = vsub.f32 %v109, %v112
    %v114 = vmul.f32 %v113, 1.442695
    %v115 = vpow.pop %v114
    %116 = vadd.xlane.f32.xlu0 %v115
    %v117 = vpop.xlane.xlu0 %116
    %v118 = vrcp.pop %v117
    %v119 = vmul.f32 %v117, %v118
    %v120 = vsub.f32 1.0, %v119
    %v121 = vmul.f32 %v118, %v120
    %v122 = vadd.f32 %v118, %v121
    %vm123 = vweird.f32 %v117
    %vm124 = vweird.f32 %v118
    %vm125 = vmor %vm123, %vm124
    %v126 = vsel %vm125, %v118, %v122
    %v127 = vand.u32 2147483647, %v117
    %vm128 = vcmp.eq.f32.partialorder %v127, 8.507059e+37
    %v129 = vand.u32 %v117, 2147483648
    %v130 = vor.u32 1.1754944e-38, %v129
    %v131 = vsel %vm128, %v130, %v126
    %v132 = vmul.f32 %v115, %v131
    %133 = vst.msk [vmem:[%s5] sm:$0xff] %vm42, %v132
    // Predicated region
    $region26: #{policy_forward.1} parent=1 // pred_check
      _
    $region27: #{policy_forward.1} parent=1 // pred_check_branch
      %135 = sbr.rel (0) target = $region29
    $region28: #{policy_forward.1} parent=1 // pred_region
      _
    $region29: #{policy_forward.1} parent=1 // pred_fallthru
      _
    // Predicated region
    $region30: #{policy_forward.1} parent=1 // pred_check
      _
    $region31: #{policy_forward.1} parent=1 // pred_check_branch
      %137 = sbr.rel (0) target = $region33
    $region32: #{policy_forward.1} parent=1 // pred_region
      _
    $region33: #{policy_forward.1} parent=1 // pred_fallthru
      _
    %138 = vsyncpa [#allocation3], 1

</llo_original>
